<compile_context>
chip_gen: v5e
topology: v5e:2x2
jax: 0.10.0
libtpu: 0.0.40
codegen_flags: <defaults>
</compile_context>

<pallas_src>
import functools

import jax
import jax.numpy as jnp
from jax.experimental import pallas as pl
from jax.experimental.pallas import tpu as pltpu


def _accuracy_kernel(targets_ref, *rest, criteria, num_classes, num_heads,
                     batch_size, blocks_per_core):
    pred_refs = rest[:num_heads]          # H refs, each [block_b, C]
    out_ref = rest[num_heads]             # [1, 1] int32, SMEM, resident per core

    block_b = targets_ref.shape[0]

    @pl.when(pl.program_id(1) == 0)
    def _():
        out_ref[0, 0] = jnp.int32(0)

    t = targets_ref[...]                  # [block_b, H] int32

    # Linear (unclamped) block index -> rows this step is responsible for.
    # Clamped duplicate blocks (see index_map) land entirely past batch_size
    # and are masked out here, so they contribute 0.
    blk_lin = pl.program_id(0) * blocks_per_core + pl.program_id(1)
    row_ids = (blk_lin * block_b
               + jax.lax.broadcasted_iota(jnp.int32, (block_b, 1), 0))
    row_valid = row_ids < batch_size      # [block_b, 1] bool

    # Hoisted once per block (JAX does not CSE iota).
    idx = jax.lax.broadcasted_iota(jnp.int32, (block_b, num_classes), 1)

    if criteria == "hamming":
        hits = jnp.zeros((block_b, 1), jnp.int32)
    else:
        all_eq = row_valid

    for h in range(num_heads):
        # argmax over classes, first-max-wins like torch.argmax.
        # NOTE: rows whose max is NaN get a sentinel index (never matches);
        # torch.argmax would return the NaN's index — edge-case divergence.
        x = pred_refs[h][...]                                            # [block_b, C]
        if x.dtype not in (jnp.float32, jnp.bfloat16):
            x = x.astype(jnp.float32)
        m = jnp.max(x, axis=-1, keepdims=True)                           # [block_b, 1]
        cand = jnp.where(x == m, idx, jnp.int32(num_classes))
        pred_idx = jnp.min(cand, axis=-1, keepdims=True)                 # [block_b, 1]
        eq_h = pred_idx == t[:, h:h + 1]                                 # [block_b, 1]
        if criteria == "hamming":
            hits = hits + eq_h.astype(jnp.int32)
        else:
            all_eq = all_eq & eq_h

    if criteria == "hamming":
        block_count = jnp.sum(jnp.where(row_valid, hits, 0))
    else:
        block_count = jnp.sum(all_eq.astype(jnp.int32))

    out_ref[0, 0] = out_ref[0, 0] + block_count


def _round_up(x, m):
    return ((x + m - 1) // m) * m


def _pick_block_b(B, H, C, preds_dtype):
    """Largest batch block whose double-buffered, lane-padded tiles fit VMEM.

    Uses padded footprints: preds last dim pads to 128 lanes per head, targets
    last dim pads to 128 lanes, and block_b is rounded to the preds dtype's
    sublane multiple (8 f32, 16 bf16, 32 int8/fp8).  Budget is v7x-safe.
    """
    itemsize = jnp.dtype(preds_dtype).itemsize
    sublane = max(8, 32 // max(itemsize, 1))
    budget = 40 * 1024 * 1024
    preds_row = H * _round_up(C, 128) * itemsize   # H heads, each lane-padded
    tgt_row = _round_up(H, 128) * 4                # int32 targets, lane-padded
    per_row = 2 * (preds_row + tgt_row)            # double-buffered
    blk = budget // max(per_row, 1)
    if blk >= B:
        return B
    return max(sublane, (blk // sublane) * sublane)


@functools.partial(jax.jit, static_argnames=("criteria", "block_b"))
def _multiclass_accuracy_impl(preds, targets, *, criteria, block_b=None):
    preds = tuple(preds)
    num_heads = len(preds)
    B, C = preds[0].shape
    targets = targets.astype(jnp.int32)
    itemsize = jnp.dtype(preds[0].dtype).itemsize

    if block_b is None:
        block_b = _pick_block_b(B, num_heads, C, preds[0].dtype)
    num_blocks = pl.cdiv(B, block_b)

    # Split the block axis across (up to) 2 TensorCores on v7x; on 1-TC chips
    # the "parallel" axis simply runs sequentially with per-slice accumulators.
    num_cores = 2 if num_blocks >= 2 else 1
    blocks_per_core = pl.cdiv(num_blocks, num_cores)

    last_block = num_blocks - 1

    def block_index_map(c, i):
        # Clamp out-of-range blocks (kernel masks their rows via batch_size).
        return (jnp.minimum(c * blocks_per_core + i, last_block), 0)

    kernel = functools.partial(
        _accuracy_kernel, criteria=criteria, num_classes=C,
        num_heads=num_heads, batch_size=B, blocks_per_core=blocks_per_core)

    correct = pl.pallas_call(
        kernel,
        out_shape=jax.ShapeDtypeStruct((num_cores, 1), jnp.int32),
        grid=(num_cores, blocks_per_core),
        in_specs=([pl.BlockSpec((block_b, num_heads), block_index_map)]
                  + [pl.BlockSpec((block_b, C), block_index_map)
                     for _ in range(num_heads)]),
        out_specs=pl.BlockSpec((1, 1), lambda c, i: (c, 0),
                               memory_space=pltpu.MemorySpace.SMEM),
        compiler_params=pltpu.CompilerParams(
            dimension_semantics=("parallel", "arbitrary"),
            vmem_limit_bytes=48 * 1024 * 1024),
        cost_estimate=pl.CostEstimate(
            flops=3 * B * num_heads * C,
            transcendentals=0,
            bytes_accessed=(B * num_heads * C * itemsize
                            + B * num_heads * 4 + num_cores * 4)),
    )(targets, *preds)

    num_correct = jnp.sum(correct)                      # sum per-core partials
    num_total = B * num_heads if criteria == "hamming" else B
    accuracy = num_correct.astype(jnp.float32) / jnp.float32(num_total)
    return num_correct, accuracy


def multiclass_accuracy(preds_list, targets, *, criteria="hamming", block_b=None):
    """Pallas equivalent of MultiClassAccuracyMetrics.update/forward.

    preds_list: list of H arrays, each [B, C] logits (any float dtype)
    targets:    [B, H] integer class labels
    Returns (num_correct, num_total, accuracy); num_correct and accuracy are
    device scalars (no host sync), num_total is a static Python int.
    """
    num_correct, accuracy = _multiclass_accuracy_impl(
        tuple(preds_list), targets, criteria=criteria, block_b=block_b)
    num_total = (targets.shape[0] * targets.shape[1]
                 if criteria == "hamming" else targets.shape[0])
    return num_correct, num_total, accuracy


if __name__ == "__main__":
    key = jax.random.PRNGKey(0)

    def reference(preds_list, targets, criteria):
        stacked = jnp.stack(preds_list, axis=1)
        pred = jnp.argmax(stacked, axis=2)
        eq = pred == targets
        if criteria == "hamming":
            return int(jnp.sum(eq)), int(targets.size)
        return int(jnp.sum(jnp.all(eq, axis=1))), int(targets.shape[0])

    cases = [
        # (dtype, B, H, C, block_b override)
        (jnp.float32, 4, 8, 32, None),    # single full-array block (B < 8)
        (jnp.bfloat16, 20, 8, 32, 8),     # multi-block grid, 2-way core split,
                                          # clamped tail block + masked rows
        (jnp.float32, 40, 4, 16, 16),     # even multi-block split, f32 path
    ]

    for dtype, B, H, C, blk in cases:
        key, k_preds, k_tgt = jax.random.split(key, 3)
        head_keys = jax.random.split(k_preds, H)
        preds_list = [jax.random.normal(head_keys[h], (B, C)).astype(dtype)
                      for h in range(H)]
        targets = jax.random.randint(k_tgt, (B, H), 0, C, dtype=jnp.int32)

        for criteria in ("hamming", "exact"):
            n_correct, n_total, acc = multiclass_accuracy(
                preds_list, targets, criteria=criteria, block_b=blk)
            jax.block_until_ready(n_correct)

            ref_correct, ref_total = reference(preds_list, targets, criteria)
            assert int(n_correct) == ref_correct, (
                str(dtype), criteria, int(n_correct), ref_correct)
            assert n_total == ref_total, (criteria, n_total, ref_total)
            assert abs(float(acc) - ref_correct / ref_total) < 1e-6

    print("KERNEL_OK")
</pallas_src>

<mosaic_0001>
module attributes {stable_mosaic.version = 11 : i64} {
  func.func @_accuracy_kernel(%arg0: i32, %arg1: i32, %arg2: memref<4x8xi32, #tpu.memory_space<vmem>>, %arg3: memref<4x32xf32, #tpu.memory_space<vmem>>, %arg4: memref<4x32xf32, #tpu.memory_space<vmem>>, %arg5: memref<4x32xf32, #tpu.memory_space<vmem>>, %arg6: memref<4x32xf32, #tpu.memory_space<vmem>>, %arg7: memref<4x32xf32, #tpu.memory_space<vmem>>, %arg8: memref<4x32xf32, #tpu.memory_space<vmem>>, %arg9: memref<4x32xf32, #tpu.memory_space<vmem>>, %arg10: memref<4x32xf32, #tpu.memory_space<vmem>>, %arg11: memref<1x1xi32, #tpu.memory_space<smem>>) attributes {dimension_semantics = [#tpu.dimension_semantics<parallel>, #tpu.dimension_semantics<arbitrary>], iteration_bounds = array<i64: 1, 1>, scalar_prefetch = 0 : i64, scratch_operands = 0 : i64, tpu.core_type = #tpu.core_type<tc>, window_params = [{transform_indices = @transform_0, window_bounds = array<i64: 4, 8>}, {transform_indices = @transform_1, window_bounds = array<i64: 4, 32>}, {transform_indices = @transform_2, window_bounds = array<i64: 4, 32>}, {transform_indices = @transform_3, window_bounds = array<i64: 4, 32>}, {transform_indices = @transform_4, window_bounds = array<i64: 4, 32>}, {transform_indices = @transform_5, window_bounds = array<i64: 4, 32>}, {transform_indices = @transform_6, window_bounds = array<i64: 4, 32>}, {transform_indices = @transform_7, window_bounds = array<i64: 4, 32>}, {transform_indices = @transform_8, window_bounds = array<i64: 4, 32>}, {transform_indices = @transform_9, window_bounds = array<i64: 1, 1>}]} {
    %c0_i32 = arith.constant 0 : i32
    %0 = arith.cmpi eq, %arg1, %c0_i32 : i32
    %1 = arith.extui %0 : i1 to i32
    %c0_i32_0 = arith.constant 0 : i32
    %2 = arith.cmpi ne, %1, %c0_i32_0 : i32
    scf.if %2 {
      %c0_i32_48 = arith.constant 0 : i32
      %c0_49 = arith.constant 0 : index
      %c0_50 = arith.constant 0 : index
      %127 = memref.load %arg11[%c0_49, %c0_50] : memref<1x1xi32, #tpu.memory_space<smem>>
      memref.store %c0_i32_48, %arg11[%c0_49, %c0_50] : memref<1x1xi32, #tpu.memory_space<smem>>
    } else {
    }
    %c0 = arith.constant 0 : index
    %c0_1 = arith.constant 0 : index
    %3 = vector.load %arg2[%c0, %c0_1] : memref<4x8xi32, #tpu.memory_space<vmem>>, vector<4x8xi32>
    %c1_i32 = arith.constant 1 : i32
    %4 = arith.muli %arg0, %c1_i32 : i32
    %5 = arith.addi %4, %arg1 : i32
    %c4_i32 = arith.constant 4 : i32
    %6 = arith.muli %5, %c4_i32 : i32
    %7 = tpu.iota {dimensions = array<i32: 0>} : vector<4x1xi32>
    %8 = vector.broadcast %6 : i32 to vector<4x1xi32>
    %9 = arith.addi %8, %7 : vector<4x1xi32>
    %c4_i32_2 = arith.constant 4 : i32
    %10 = vector.broadcast %c4_i32_2 : i32 to vector<4x1xi32>
    %11 = arith.cmpi slt, %9, %10 : vector<4x1xi32>
    %12 = tpu.iota {dimensions = array<i32: 1>} : vector<4x32xi32>
    %c0_i32_3 = arith.constant 0 : i32
    %13 = vector.broadcast %c0_i32_3 : i32 to vector<4x1xi32>
    %c0_4 = arith.constant 0 : index
    %c0_5 = arith.constant 0 : index
    %14 = vector.load %arg3[%c0_4, %c0_5] : memref<4x32xf32, #tpu.memory_space<vmem>>, vector<4x32xf32>
    %cst = arith.constant dense<0xFF800000> : vector<4xf32>
    %15 = vector.multi_reduction <maximumf>, %14, %cst [1] : vector<4x32xf32> to vector<4xf32>
    %16 = vector.shape_cast %15 : vector<4xf32> to vector<4x1xf32>
    %17 = vector.broadcast %16 : vector<4x1xf32> to vector<4x32xf32>
    %18 = arith.cmpf oeq, %14, %17 : vector<4x32xf32>
    %c32_i32 = arith.constant 32 : i32
    %19 = vector.broadcast %c32_i32 : i32 to vector<4x32xi32>
    %20 = arith.select %18, %12, %19 : vector<4x32xi1>, vector<4x32xi32>
    %cst_6 = arith.constant dense<2147483647> : vector<4xi32>
    %21 = vector.multi_reduction <minsi>, %20, %cst_6 [1] : vector<4x32xi32> to vector<4xi32>
    %22 = vector.shape_cast %21 : vector<4xi32> to vector<4x1xi32>
    %23 = vector.extract_strided_slice %3 {offsets = [0, 0], sizes = [4, 1], strides = [1, 1]} : vector<4x8xi32> to vector<4x1xi32>
    %24 = arith.cmpi eq, %22, %23 : vector<4x1xi32>
    %25 = arith.extui %24 : vector<4x1xi1> to vector<4x1xi32>
    %26 = arith.addi %13, %25 : vector<4x1xi32>
    %c0_7 = arith.constant 0 : index
    %c0_8 = arith.constant 0 : index
    %27 = vector.load %arg4[%c0_7, %c0_8] : memref<4x32xf32, #tpu.memory_space<vmem>>, vector<4x32xf32>
    %cst_9 = arith.constant dense<0xFF800000> : vector<4xf32>
    %28 = vector.multi_reduction <maximumf>, %27, %cst_9 [1] : vector<4x32xf32> to vector<4xf32>
    %29 = vector.shape_cast %28 : vector<4xf32> to vector<4x1xf32>
    %30 = vector.broadcast %29 : vector<4x1xf32> to vector<4x32xf32>
    %31 = arith.cmpf oeq, %27, %30 : vector<4x32xf32>
    %c32_i32_10 = arith.constant 32 : i32
    %32 = vector.broadcast %c32_i32_10 : i32 to vector<4x32xi32>
    %33 = arith.select %31, %12, %32 : vector<4x32xi1>, vector<4x32xi32>
    %cst_11 = arith.constant dense<2147483647> : vector<4xi32>
    %34 = vector.multi_reduction <minsi>, %33, %cst_11 [1] : vector<4x32xi32> to vector<4xi32>
    %35 = vector.shape_cast %34 : vector<4xi32> to vector<4x1xi32>
    %36 = vector.extract_strided_slice %3 {offsets = [0, 1], sizes = [4, 1], strides = [1, 1]} : vector<4x8xi32> to vector<4x1xi32>
    %37 = arith.cmpi eq, %35, %36 : vector<4x1xi32>
    %38 = arith.extui %37 : vector<4x1xi1> to vector<4x1xi32>
    %39 = arith.addi %26, %38 : vector<4x1xi32>
    %c0_12 = arith.constant 0 : index
    %c0_13 = arith.constant 0 : index
    %40 = vector.load %arg5[%c0_12, %c0_13] : memref<4x32xf32, #tpu.memory_space<vmem>>, vector<4x32xf32>
    %cst_14 = arith.constant dense<0xFF800000> : vector<4xf32>
    %41 = vector.multi_reduction <maximumf>, %40, %cst_14 [1] : vector<4x32xf32> to vector<4xf32>
    %42 = vector.shape_cast %41 : vector<4xf32> to vector<4x1xf32>
    %43 = vector.broadcast %42 : vector<4x1xf32> to vector<4x32xf32>
    %44 = arith.cmpf oeq, %40, %43 : vector<4x32xf32>
    %c32_i32_15 = arith.constant 32 : i32
    %45 = vector.broadcast %c32_i32_15 : i32 to vector<4x32xi32>
    %46 = arith.select %44, %12, %45 : vector<4x32xi1>, vector<4x32xi32>
    %cst_16 = arith.constant dense<2147483647> : vector<4xi32>
    %47 = vector.multi_reduction <minsi>, %46, %cst_16 [1] : vector<4x32xi32> to vector<4xi32>
    %48 = vector.shape_cast %47 : vector<4xi32> to vector<4x1xi32>
    %49 = vector.extract_strided_slice %3 {offsets = [0, 2], sizes = [4, 1], strides = [1, 1]} : vector<4x8xi32> to vector<4x1xi32>
    %50 = arith.cmpi eq, %48, %49 : vector<4x1xi32>
    %51 = arith.extui %50 : vector<4x1xi1> to vector<4x1xi32>
    %52 = arith.addi %39, %51 : vector<4x1xi32>
    %c0_17 = arith.constant 0 : index
    %c0_18 = arith.constant 0 : index
    %53 = vector.load %arg6[%c0_17, %c0_18] : memref<4x32xf32, #tpu.memory_space<vmem>>, vector<4x32xf32>
    %cst_19 = arith.constant dense<0xFF800000> : vector<4xf32>
    %54 = vector.multi_reduction <maximumf>, %53, %cst_19 [1] : vector<4x32xf32> to vector<4xf32>
    %55 = vector.shape_cast %54 : vector<4xf32> to vector<4x1xf32>
    %56 = vector.broadcast %55 : vector<4x1xf32> to vector<4x32xf32>
    %57 = arith.cmpf oeq, %53, %56 : vector<4x32xf32>
    %c32_i32_20 = arith.constant 32 : i32
    %58 = vector.broadcast %c32_i32_20 : i32 to vector<4x32xi32>
    %59 = arith.select %57, %12, %58 : vector<4x32xi1>, vector<4x32xi32>
    %cst_21 = arith.constant dense<2147483647> : vector<4xi32>
    %60 = vector.multi_reduction <minsi>, %59, %cst_21 [1] : vector<4x32xi32> to vector<4xi32>
    %61 = vector.shape_cast %60 : vector<4xi32> to vector<4x1xi32>
    %62 = vector.extract_strided_slice %3 {offsets = [0, 3], sizes = [4, 1], strides = [1, 1]} : vector<4x8xi32> to vector<4x1xi32>
    %63 = arith.cmpi eq, %61, %62 : vector<4x1xi32>
    %64 = arith.extui %63 : vector<4x1xi1> to vector<4x1xi32>
    %65 = arith.addi %52, %64 : vector<4x1xi32>
    %c0_22 = arith.constant 0 : index
    %c0_23 = arith.constant 0 : index
    %66 = vector.load %arg7[%c0_22, %c0_23] : memref<4x32xf32, #tpu.memory_space<vmem>>, vector<4x32xf32>
    %cst_24 = arith.constant dense<0xFF800000> : vector<4xf32>
    %67 = vector.multi_reduction <maximumf>, %66, %cst_24 [1] : vector<4x32xf32> to vector<4xf32>
    %68 = vector.shape_cast %67 : vector<4xf32> to vector<4x1xf32>
    %69 = vector.broadcast %68 : vector<4x1xf32> to vector<4x32xf32>
    %70 = arith.cmpf oeq, %66, %69 : vector<4x32xf32>
    %c32_i32_25 = arith.constant 32 : i32
    %71 = vector.broadcast %c32_i32_25 : i32 to vector<4x32xi32>
    %72 = arith.select %70, %12, %71 : vector<4x32xi1>, vector<4x32xi32>
    %cst_26 = arith.constant dense<2147483647> : vector<4xi32>
    %73 = vector.multi_reduction <minsi>, %72, %cst_26 [1] : vector<4x32xi32> to vector<4xi32>
    %74 = vector.shape_cast %73 : vector<4xi32> to vector<4x1xi32>
    %75 = vector.extract_strided_slice %3 {offsets = [0, 4], sizes = [4, 1], strides = [1, 1]} : vector<4x8xi32> to vector<4x1xi32>
    %76 = arith.cmpi eq, %74, %75 : vector<4x1xi32>
    %77 = arith.extui %76 : vector<4x1xi1> to vector<4x1xi32>
    %78 = arith.addi %65, %77 : vector<4x1xi32>
    %c0_27 = arith.constant 0 : index
    %c0_28 = arith.constant 0 : index
    %79 = vector.load %arg8[%c0_27, %c0_28] : memref<4x32xf32, #tpu.memory_space<vmem>>, vector<4x32xf32>
    %cst_29 = arith.constant dense<0xFF800000> : vector<4xf32>
    %80 = vector.multi_reduction <maximumf>, %79, %cst_29 [1] : vector<4x32xf32> to vector<4xf32>
    %81 = vector.shape_cast %80 : vector<4xf32> to vector<4x1xf32>
    %82 = vector.broadcast %81 : vector<4x1xf32> to vector<4x32xf32>
    %83 = arith.cmpf oeq, %79, %82 : vector<4x32xf32>
    %c32_i32_30 = arith.constant 32 : i32
    %84 = vector.broadcast %c32_i32_30 : i32 to vector<4x32xi32>
    %85 = arith.select %83, %12, %84 : vector<4x32xi1>, vector<4x32xi32>
    %cst_31 = arith.constant dense<2147483647> : vector<4xi32>
    %86 = vector.multi_reduction <minsi>, %85, %cst_31 [1] : vector<4x32xi32> to vector<4xi32>
    %87 = vector.shape_cast %86 : vector<4xi32> to vector<4x1xi32>
    %88 = vector.extract_strided_slice %3 {offsets = [0, 5], sizes = [4, 1], strides = [1, 1]} : vector<4x8xi32> to vector<4x1xi32>
    %89 = arith.cmpi eq, %87, %88 : vector<4x1xi32>
    %90 = arith.extui %89 : vector<4x1xi1> to vector<4x1xi32>
    %91 = arith.addi %78, %90 : vector<4x1xi32>
    %c0_32 = arith.constant 0 : index
    %c0_33 = arith.constant 0 : index
    %92 = vector.load %arg9[%c0_32, %c0_33] : memref<4x32xf32, #tpu.memory_space<vmem>>, vector<4x32xf32>
    %cst_34 = arith.constant dense<0xFF800000> : vector<4xf32>
    %93 = vector.multi_reduction <maximumf>, %92, %cst_34 [1] : vector<4x32xf32> to vector<4xf32>
    %94 = vector.shape_cast %93 : vector<4xf32> to vector<4x1xf32>
    %95 = vector.broadcast %94 : vector<4x1xf32> to vector<4x32xf32>
    %96 = arith.cmpf oeq, %92, %95 : vector<4x32xf32>
    %c32_i32_35 = arith.constant 32 : i32
    %97 = vector.broadcast %c32_i32_35 : i32 to vector<4x32xi32>
    %98 = arith.select %96, %12, %97 : vector<4x32xi1>, vector<4x32xi32>
    %cst_36 = arith.constant dense<2147483647> : vector<4xi32>
    %99 = vector.multi_reduction <minsi>, %98, %cst_36 [1] : vector<4x32xi32> to vector<4xi32>
    %100 = vector.shape_cast %99 : vector<4xi32> to vector<4x1xi32>
    %101 = vector.extract_strided_slice %3 {offsets = [0, 6], sizes = [4, 1], strides = [1, 1]} : vector<4x8xi32> to vector<4x1xi32>
    %102 = arith.cmpi eq, %100, %101 : vector<4x1xi32>
    %103 = arith.extui %102 : vector<4x1xi1> to vector<4x1xi32>
    %104 = arith.addi %91, %103 : vector<4x1xi32>
    %c0_37 = arith.constant 0 : index
    %c0_38 = arith.constant 0 : index
    %105 = vector.load %arg10[%c0_37, %c0_38] : memref<4x32xf32, #tpu.memory_space<vmem>>, vector<4x32xf32>
    %cst_39 = arith.constant dense<0xFF800000> : vector<4xf32>
    %106 = vector.multi_reduction <maximumf>, %105, %cst_39 [1] : vector<4x32xf32> to vector<4xf32>
    %107 = vector.shape_cast %106 : vector<4xf32> to vector<4x1xf32>
    %108 = vector.broadcast %107 : vector<4x1xf32> to vector<4x32xf32>
    %109 = arith.cmpf oeq, %105, %108 : vector<4x32xf32>
    %c32_i32_40 = arith.constant 32 : i32
    %110 = vector.broadcast %c32_i32_40 : i32 to vector<4x32xi32>
    %111 = arith.select %109, %12, %110 : vector<4x32xi1>, vector<4x32xi32>
    %cst_41 = arith.constant dense<2147483647> : vector<4xi32>
    %112 = vector.multi_reduction <minsi>, %111, %cst_41 [1] : vector<4x32xi32> to vector<4xi32>
    %113 = vector.shape_cast %112 : vector<4xi32> to vector<4x1xi32>
    %114 = vector.extract_strided_slice %3 {offsets = [0, 7], sizes = [4, 1], strides = [1, 1]} : vector<4x8xi32> to vector<4x1xi32>
    %115 = arith.cmpi eq, %113, %114 : vector<4x1xi32>
    %116 = arith.extui %115 : vector<4x1xi1> to vector<4x1xi32>
    %117 = arith.addi %104, %116 : vector<4x1xi32>
    %c0_i32_42 = arith.constant 0 : i32
    %118 = vector.broadcast %c0_i32_42 : i32 to vector<4x1xi32>
    %119 = arith.select %11, %117, %118 : vector<4x1xi1>, vector<4x1xi32>
    %120 = vector.shape_cast %119 : vector<4x1xi32> to vector<1x4x1xi32>
    %cst_43 = arith.constant dense<0> : vector<1xi32>
    %121 = vector.multi_reduction <add>, %120, %cst_43 [1, 2] : vector<1x4x1xi32> to vector<1xi32>
    %122 = vector.shape_cast %121 : vector<1xi32> to vector<1x1x1xi32>
    %123 = vector.extract %122[0, 0, 0] : i32 from vector<1x1x1xi32>
    %c0_44 = arith.constant 0 : index
    %c0_45 = arith.constant 0 : index
    %124 = memref.load %arg11[%c0_44, %c0_45] : memref<1x1xi32, #tpu.memory_space<smem>>
    %125 = arith.addi %124, %123 : i32
    %c0_46 = arith.constant 0 : index
    %c0_47 = arith.constant 0 : index
    %126 = memref.load %arg11[%c0_46, %c0_47] : memref<1x1xi32, #tpu.memory_space<smem>>
    memref.store %125, %arg11[%c0_46, %c0_47] : memref<1x1xi32, #tpu.memory_space<smem>>
    return
  }
  func.func @transform_0(%arg0: i32, %arg1: i32) -> (i32, i32) {
    %c1_i32 = arith.constant 1 : i32
    %0 = arith.muli %arg0, %c1_i32 : i32
    %1 = arith.addi %0, %arg1 : i32
    %c0_i32 = arith.constant 0 : i32
    %2 = arith.minsi %1, %c0_i32 : i32
    %c0_i32_0 = arith.constant 0 : i32
    %c0_i32_1 = arith.constant 0 : i32
    return %2, %c0_i32_0 : i32, i32
  }
  func.func @transform_1(%arg0: i32, %arg1: i32) -> (i32, i32) {
    %c1_i32 = arith.constant 1 : i32
    %0 = arith.muli %arg0, %c1_i32 : i32
    %1 = arith.addi %0, %arg1 : i32
    %c0_i32 = arith.constant 0 : i32
    %2 = arith.minsi %1, %c0_i32 : i32
    %c0_i32_0 = arith.constant 0 : i32
    %c0_i32_1 = arith.constant 0 : i32
    return %2, %c0_i32_0 : i32, i32
  }
  func.func @transform_2(%arg0: i32, %arg1: i32) -> (i32, i32) {
    %c1_i32 = arith.constant 1 : i32
    %0 = arith.muli %arg0, %c1_i32 : i32
    %1 = arith.addi %0, %arg1 : i32
    %c0_i32 = arith.constant 0 : i32
    %2 = arith.minsi %1, %c0_i32 : i32
    %c0_i32_0 = arith.constant 0 : i32
    %c0_i32_1 = arith.constant 0 : i32
    return %2, %c0_i32_0 : i32, i32
  }
  func.func @transform_3(%arg0: i32, %arg1: i32) -> (i32, i32) {
    %c1_i32 = arith.constant 1 : i32
    %0 = arith.muli %arg0, %c1_i32 : i32
    %1 = arith.addi %0, %arg1 : i32
    %c0_i32 = arith.constant 0 : i32
    %2 = arith.minsi %1, %c0_i32 : i32
    %c0_i32_0 = arith.constant 0 : i32
    %c0_i32_1 = arith.constant 0 : i32
    return %2, %c0_i32_0 : i32, i32
  }
  func.func @transform_4(%arg0: i32, %arg1: i32) -> (i32, i32) {
    %c1_i32 = arith.constant 1 : i32
    %0 = arith.muli %arg0, %c1_i32 : i32
    %1 = arith.addi %0, %arg1 : i32
    %c0_i32 = arith.constant 0 : i32
    %2 = arith.minsi %1, %c0_i32 : i32
    %c0_i32_0 = arith.constant 0 : i32
    %c0_i32_1 = arith.constant 0 : i32
    return %2, %c0_i32_0 : i32, i32
  }
  func.func @transform_5(%arg0: i32, %arg1: i32) -> (i32, i32) {
    %c1_i32 = arith.constant 1 : i32
    %0 = arith.muli %arg0, %c1_i32 : i32
    %1 = arith.addi %0, %arg1 : i32
    %c0_i32 = arith.constant 0 : i32
    %2 = arith.minsi %1, %c0_i32 : i32
    %c0_i32_0 = arith.constant 0 : i32
    %c0_i32_1 = arith.constant 0 : i32
    return %2, %c0_i32_0 : i32, i32
  }
  func.func @transform_6(%arg0: i32, %arg1: i32) -> (i32, i32) {
    %c1_i32 = arith.constant 1 : i32
    %0 = arith.muli %arg0, %c1_i32 : i32
    %1 = arith.addi %0, %arg1 : i32
    %c0_i32 = arith.constant 0 : i32
    %2 = arith.minsi %1, %c0_i32 : i32
    %c0_i32_0 = arith.constant 0 : i32
    %c0_i32_1 = arith.constant 0 : i32
    return %2, %c0_i32_0 : i32, i32
  }
  func.func @transform_7(%arg0: i32, %arg1: i32) -> (i32, i32) {
    %c1_i32 = arith.constant 1 : i32
    %0 = arith.muli %arg0, %c1_i32 : i32
    %1 = arith.addi %0, %arg1 : i32
    %c0_i32 = arith.constant 0 : i32
    %2 = arith.minsi %1, %c0_i32 : i32
    %c0_i32_0 = arith.constant 0 : i32
    %c0_i32_1 = arith.constant 0 : i32
    return %2, %c0_i32_0 : i32, i32
  }
  func.func @transform_8(%arg0: i32, %arg1: i32) -> (i32, i32) {
    %c1_i32 = arith.constant 1 : i32
    %0 = arith.muli %arg0, %c1_i32 : i32
    %1 = arith.addi %0, %arg1 : i32
    %c0_i32 = arith.constant 0 : i32
    %2 = arith.minsi %1, %c0_i32 : i32
    %c0_i32_0 = arith.constant 0 : i32
    %c0_i32_1 = arith.constant 0 : i32
    return %2, %c0_i32_0 : i32, i32
  }
  func.func @transform_9(%arg0: i32, %arg1: i32) -> (i32, i32) {
    %c0_i32 = arith.constant 0 : i32
    %c0_i32_0 = arith.constant 0 : i32
    return %arg0, %c0_i32 : i32, i32
  }
}

</mosaic_0001>

<llo_original>
// kernel: _multiclass_accuracy_impl.1
$region0: #{_multiclass_accuracy_impl.1}
  #allocation0 [shape = 'u32[]', space=smem, size = 0x4, offset = 0x4, fixed_abs, tag = 'smem constant byte address 0x4 - core index']
  #allocation1 [shape = 'u32[72,128]{1,0:T(1,128)}', space=vmem, size = 0x9000, scoped, tag = 'internal scratch']
  %s0 = inlined_call_operand.vmem [shape: s32[4,8], index: 0, kind: input, shape index: {}]
  %s1 = inlined_call_operand.hbm [shape: f32[4,32], index: 1, kind: input, shape index: {}]
  %s2 = inlined_call_operand.hbm [shape: f32[4,32], index: 2, kind: input, shape index: {}]
  %s3 = inlined_call_operand.hbm [shape: f32[4,32], index: 3, kind: input, shape index: {}]
  %s4 = inlined_call_operand.hbm [shape: f32[4,32], index: 4, kind: input, shape index: {}]
  %s5 = inlined_call_operand.hbm [shape: f32[4,32], index: 5, kind: input, shape index: {}]
  %s6 = inlined_call_operand.hbm [shape: f32[4,32], index: 6, kind: input, shape index: {}]
  %s7 = inlined_call_operand.hbm [shape: f32[4,32], index: 7, kind: input, shape index: {}]
  %s8 = inlined_call_operand.hbm [shape: f32[4,32], index: 8, kind: input, shape index: {}]
  %s9 = inlined_call_operand.hbm [shape: s32[1,1], index: 9, kind: output, shape index: {}]
  %s10 = sld [smem:[#allocation0]]
  $region82: #{_multiclass_accuracy_impl.1} parent=0
    _
  %s12 = ssub.s32 1, %s10
  %s13 = scalar_select 0, %s12, %s10
  $region1: #{_multiclass_accuracy_impl.1} parent=0
    #allocation2 [shape = 'u8[2048]{0}', space=vmem, size = 0x800, scoped, tag = 'input window, operand 1, single buffered']
    #allocation3 [shape = 's32[1]{0}', space=sflag, size = 0x4, scoped, tag = 'scoped memory for _multiclass_accuracy_impl.1']
    #allocation4 [shape = 's32[1]{0}', space=sflag, size = 0x4, scoped, tag = 'scoped memory for _multiclass_accuracy_impl.1']
    #allocation5 [shape = 'u8[2048]{0}', space=vmem, size = 0x800, scoped, tag = 'input window, operand 2, single buffered']
    #allocation6 [shape = 's32[1]{0}', space=sflag, size = 0x4, scoped, tag = 'scoped memory for _multiclass_accuracy_impl.1']
    #allocation7 [shape = 'u8[2048]{0}', space=vmem, size = 0x800, scoped, tag = 'input window, operand 3, single buffered']
    #allocation8 [shape = 'u8[2048]{0}', space=vmem, size = 0x800, scoped, tag = 'input window, operand 4, single buffered']
    #allocation9 [shape = 's32[1]{0}', space=sflag, size = 0x4, scoped, tag = 'scoped memory for _multiclass_accuracy_impl.1']
    #allocation10 [shape = 'u8[2048]{0}', space=vmem, size = 0x800, scoped, tag = 'input window, operand 5, single buffered']
    #allocation11 [shape = 'u8[2048]{0}', space=vmem, size = 0x800, scoped, tag = 'input window, operand 6, single buffered']
    #allocation12 [shape = 's32[1]{0}', space=sflag, size = 0x4, scoped, tag = 'scoped memory for _multiclass_accuracy_impl.1']
    #allocation13 [shape = 'u8[2048]{0}', space=vmem, size = 0x800, scoped, tag = 'input window, operand 7, single buffered']
    #allocation14 [shape = 'u8[2048]{0}', space=vmem, size = 0x800, scoped, tag = 'input window, operand 8, single buffered']
    #allocation15 [shape = 's32[1]{0}', space=sflag, size = 0x4, scoped, tag = 'scoped memory for _multiclass_accuracy_impl.1']
    #allocation16 [shape = 'u8[512]{0}', space=smem, size = 0x200, scoped, tag = 'output window, operand 0, single buffered']
    %14 = vsyncpa [#allocation3], 0
    %15 = vsyncpa [#allocation6], 0
    %16 = vsyncpa [#allocation9], 0
    %17 = vsyncpa [#allocation12], 0
    %18 = vsyncpa [#allocation15], 0
    %19 = vsyncpa [#allocation4], 0
    // Predicated region
    $region2: #{_multiclass_accuracy_impl.1} parent=1 // pred_check
      _
    $region3: #{_multiclass_accuracy_impl.1} parent=1 // pred_check_branch
      %21 = sbr.rel (0) target = $region5
    $region4: #{_multiclass_accuracy_impl.1} parent=1 // pred_region
      %s22 = sadd.s32 0, 0
      %p23 = scmp.lt.s32.totalorder %s22, 0
      %s24 = scalar_select %p23, %s22, 0
      %p25 = scmp.lt.s32.totalorder %s24, 0
      %s26 = scalar_select %p25, %s24, 0
      %s27 = smul.addr %s26, 4
      %s28 = scalar_lea.vmem %s0, %s27
      %s29 = sadd.s32 0, 0
      %p30 = scmp.lt.s32.totalorder %s29, 0
      %s31 = scalar_select %p30, %s29, 0
    $region5: #{_multiclass_accuracy_impl.1} parent=1 // pred_fallthru
      _
    // Predicated region
    $region6: #{_multiclass_accuracy_impl.1} parent=1 // pred_check
      _
    $region7: #{_multiclass_accuracy_impl.1} parent=1 // pred_check_branch
      %33 = sbr.rel (0) target = $region9
    $region8: #{_multiclass_accuracy_impl.1} parent=1 // pred_region
      %s34 = sadd.s32 0, 0
      %p35 = scmp.lt.s32.totalorder %s34, 0
      %s36 = scalar_select %p35, %s34, 0
      %38 = vsyncadd [#allocation3], 0
      %s39 = smul.addr %s36, 4
      %s40 = scalar_lea.hbm %s1, %s39
      %s42 = sshll.u32 %s40, 4
      %s43 = int_to_ptr.hbm [resolvable:$true] %s42
      %s44 = sshll.u32 [#allocation2], 4
      %s45 = int_to_ptr.vmem [resolvable:$true] %s44
      %47 = dma.hbm_to_vmem [thread:$0]  %s43, 64, %s45, [#allocation3]
    $region9: #{_multiclass_accuracy_impl.1} parent=1 // pred_fallthru
      _
    // Predicated region
    $region10: #{_multiclass_accuracy_impl.1} parent=1 // pred_check
      _
    $region11: #{_multiclass_accuracy_impl.1} parent=1 // pred_check_branch
      %49 = sbr.rel (0) target = $region13
    $region12: #{_multiclass_accuracy_impl.1} parent=1 // pred_region
      %s50 = sadd.s32 0, 0
      %p51 = scmp.lt.s32.totalorder %s50, 0
      %s52 = scalar_select %p51, %s50, 0
      %54 = vsyncadd [#allocation6], 0
      %s55 = smul.addr %s52, 4
      %s56 = scalar_lea.hbm %s2, %s55
      %s58 = sshll.u32 %s56, 4
      %s59 = int_to_ptr.hbm [resolvable:$true] %s58
      %s60 = sshll.u32 [#allocation5], 4
      %s61 = int_to_ptr.vmem [resolvable:$true] %s60
      %63 = dma.hbm_to_vmem [thread:$0]  %s59, 64, %s61, [#allocation6]
    $region13: #{_multiclass_accuracy_impl.1} parent=1 // pred_fallthru
      _
    // Predicated region
    $region14: #{_multiclass_accuracy_impl.1} parent=1 // pred_check
      _
    $region15: #{_multiclass_accuracy_impl.1} parent=1 // pred_check_branch
      %65 = sbr.rel (0) target = $region17
    $region16: #{_multiclass_accuracy_impl.1} parent=1 // pred_region
      %s66 = sadd.s32 0, 0
      %p67 = scmp.lt.s32.totalorder %s66, 0
      %s68 = scalar_select %p67, %s66, 0
      %70 = vsyncadd [#allocation6], 0
      %s71 = smul.addr %s68, 4
      %s72 = scalar_lea.hbm %s3, %s71
      %s74 = sshll.u32 %s72, 4
      %s75 = int_to_ptr.hbm [resolvable:$true] %s74
      %s76 = sshll.u32 [#allocation7], 4
      %s77 = int_to_ptr.vmem [resolvable:$true] %s76
      %79 = dma.hbm_to_vmem [thread:$0]  %s75, 64, %s77, [#allocation6]
    $region17: #{_multiclass_accuracy_impl.1} parent=1 // pred_fallthru
      _
    // Predicated region
    $region18: #{_multiclass_accuracy_impl.1} parent=1 // pred_check
      _
    $region19: #{_multiclass_accuracy_impl.1} parent=1 // pred_check_branch
      %81 = sbr.rel (0) target = $region21
    $region20: #{_multiclass_accuracy_impl.1} parent=1 // pred_region
      %s82 = sadd.s32 0, 0
      %p83 = scmp.lt.s32.totalorder %s82, 0
      %s84 = scalar_select %p83, %s82, 0
      %86 = vsyncadd [#allocation9], 0
      %s87 = smul.addr %s84, 4
      %s88 = scalar_lea.hbm %s4, %s87
      %s90 = sshll.u32 %s88, 4
      %s91 = int_to_ptr.hbm [resolvable:$true] %s90
      %s92 = sshll.u32 [#allocation8], 4
      %s93 = int_to_ptr.vmem [resolvable:$true] %s92
      %95 = dma.hbm_to_vmem [thread:$0]  %s91, 64, %s93, [#allocation9]
    $region21: #{_multiclass_accuracy_impl.1} parent=1 // pred_fallthru
      _
    // Predicated region
    $region22: #{_multiclass_accuracy_impl.1} parent=1 // pred_check
      _
    $region23: #{_multiclass_accuracy_impl.1} parent=1 // pred_check_branch
      %97 = sbr.rel (0) target = $region25
    $region24: #{_multiclass_accuracy_impl.1} parent=1 // pred_region
      %s98 = sadd.s32 0, 0
      %p99 = scmp.lt.s32.totalorder %s98, 0
      %s100 = scalar_select %p99, %s98, 0
      %102 = vsyncadd [#allocation9], 0
      %s103 = smul.addr %s100, 4
      %s104 = scalar_lea.hbm %s5, %s103
      %s106 = sshll.u32 %s104, 4
      %s107 = int_to_ptr.hbm [resolvable:$true] %s106
      %s108 = sshll.u32 [#allocation10], 4
      %s109 = int_to_ptr.vmem [resolvable:$true] %s108
      %111 = dma.hbm_to_vmem [thread:$0]  %s107, 64, %s109, [#allocation9]
    $region25: #{_multiclass_accuracy_impl.1} parent=1 // pred_fallthru
      _
    // Predicated region
    $region26: #{_multiclass_accuracy_impl.1} parent=1 // pred_check
      _
    $region27: #{_multiclass_accuracy_impl.1} parent=1 // pred_check_branch
      %113 = sbr.rel (0) target = $region29
    $region28: #{_multiclass_accuracy_impl.1} parent=1 // pred_region
      %s114 = sadd.s32 0, 0
      %p115 = scmp.lt.s32.totalorder %s114, 0
      %s116 = scalar_select %p115, %s114, 0
      %118 = vsyncadd [#allocation12], 0
      %s119 = smul.addr %s116, 4
      %s120 = scalar_lea.hbm %s6, %s119
      %s122 = sshll.u32 %s120, 4
      %s123 = int_to_ptr.hbm [resolvable:$true] %s122
      %s124 = sshll.u32 [#allocation11], 4
      %s125 = int_to_ptr.vmem [resolvable:$true] %s124
      %127 = dma.hbm_to_vmem [thread:$0]  %s123, 64, %s125, [#allocation12]
    $region29: #{_multiclass_accuracy_impl.1} parent=1 // pred_fallthru
      _
    // Predicated region
    $region30: #{_multiclass_accuracy_impl.1} parent=1 // pred_check
      _
    $region31: #{_multiclass_accuracy_impl.1} parent=1 // pred_check_branch
      %129 = sbr.rel (0) target = $region33
    $region32: #{_multiclass_accuracy_impl.1} parent=1 // pred_region
      %s130 = sadd.s32 0, 0
      %p131 = scmp.lt.s32.totalorder %s130, 0
      %s132 = scalar_select %p131, %s130, 0
      %134 = vsyncadd [#allocation12], 0
      %s135 = smul.addr %s132, 4
      %s136 = scalar_lea.hbm %s7, %s135
      %s138 = sshll.u32 %s136, 4
      %s139 = int_to_ptr.hbm [resolvable:$true] %s138
      %s140 = sshll.u32 [#allocation13], 4
      %s141 = int_to_ptr.vmem [resolvable:$true] %s140
      %143 = dma.hbm_to_vmem [thread:$0]  %s139, 64, %s141, [#allocation12]
    $region33: #{_multiclass_accuracy_impl.1} parent=1 // pred_fallthru
      _
    // Predicated region
    $region34: #{_multiclass_accuracy_impl.1} parent=1 // pred_check
      _
    $region35: #{_multiclass_accuracy_impl.1} parent=1 // pred_check_branch
      %145 = sbr.rel (0) target = $region37
    $region36: #{_multiclass_accuracy_impl.1} parent=1 // pred_region
      %s146 = sadd.s32 0, 0
      %p147 = scmp.lt.s32.totalorder %s146, 0
      %s148 = scalar_select %p147, %s146, 0
      %150 = vsyncadd [#allocation15], 0
      %s151 = smul.addr %s148, 4
      %s152 = scalar_lea.hbm %s8, %s151
      %s154 = sshll.u32 %s152, 4
      %s155 = int_to_ptr.hbm [resolvable:$true] %s154
      %s156 = sshll.u32 [#allocation14], 4
      %s157 = int_to_ptr.vmem [resolvable:$true] %s156
      %159 = dma.hbm_to_vmem [thread:$0]  %s155, 64, %s157, [#allocation15]
    $region37: #{_multiclass_accuracy_impl.1} parent=1 // pred_fallthru
      _
    // Predicated region
    $region38: #{_multiclass_accuracy_impl.1} parent=1 // pred_check
      _
    $region39: #{_multiclass_accuracy_impl.1} parent=1 // pred_check_branch
      %161 = sbr.rel (0) target = $region41
    $region40: #{_multiclass_accuracy_impl.1} parent=1 // pred_region
      %163 = dma.done [#allocation3], 64
    $region41: #{_multiclass_accuracy_impl.1} parent=1 // pred_fallthru
      _
    // Predicated region
    $region42: #{_multiclass_accuracy_impl.1} parent=1 // pred_check
      _
    $region43: #{_multiclass_accuracy_impl.1} parent=1 // pred_check_branch
      %165 = sbr.rel (0) target = $region45
    $region44: #{_multiclass_accuracy_impl.1} parent=1 // pred_region
      %167 = dma.done [#allocation6], 64
    $region45: #{_multiclass_accuracy_impl.1} parent=1 // pred_fallthru
      _
    // Predicated region
    $region46: #{_multiclass_accuracy_impl.1} parent=1 // pred_check
      _
    $region47: #{_multiclass_accuracy_impl.1} parent=1 // pred_check_branch
      %169 = sbr.rel (0) target = $region49
    $region48: #{_multiclass_accuracy_impl.1} parent=1 // pred_region
      %171 = dma.done [#allocation6], 64
    $region49: #{_multiclass_accuracy_impl.1} parent=1 // pred_fallthru
      _
    // Predicated region
    $region50: #{_multiclass_accuracy_impl.1} parent=1 // pred_check
      _
    $region51: #{_multiclass_accuracy_impl.1} parent=1 // pred_check_branch
      %173 = sbr.rel (0) target = $region53
    $region52: #{_multiclass_accuracy_impl.1} parent=1 // pred_region
      %175 = dma.done [#allocation9], 64
    $region53: #{_multiclass_accuracy_impl.1} parent=1 // pred_fallthru
      _
    // Predicated region
    $region54: #{_multiclass_accuracy_impl.1} parent=1 // pred_check
      _
    $region55: #{_multiclass_accuracy_impl.1} parent=1 // pred_check_branch
      %177 = sbr.rel (0) target = $region57
    $region56: #{_multiclass_accuracy_impl.1} parent=1 // pred_region
      %179 = dma.done [#allocation9], 64
    $region57: #{_multiclass_accuracy_impl.1} parent=1 // pred_fallthru
      _
    // Predicated region
    $region58: #{_multiclass_accuracy_impl.1} parent=1 // pred_check
      _
    $region59: #{_multiclass_accuracy_impl.1} parent=1 // pred_check_branch
      %181 = sbr.rel (0) target = $region61
    $region60: #{_multiclass_accuracy_impl.1} parent=1 // pred_region
      %183 = dma.done [#allocation12], 64
    $region61: #{_multiclass_accuracy_impl.1} parent=1 // pred_fallthru
      _
    // Predicated region
    $region62: #{_multiclass_accuracy_impl.1} parent=1 // pred_check
      _
    $region63: #{_multiclass_accuracy_impl.1} parent=1 // pred_check_branch
      %185 = sbr.rel (0) target = $region65
    $region64: #{_multiclass_accuracy_impl.1} parent=1 // pred_region
      %187 = dma.done [#allocation12], 64
    $region65: #{_multiclass_accuracy_impl.1} parent=1 // pred_fallthru
      _
    // Predicated region
    $region66: #{_multiclass_accuracy_impl.1} parent=1 // pred_check
      _
    $region67: #{_multiclass_accuracy_impl.1} parent=1 // pred_check_branch
      %189 = sbr.rel (0) target = $region69
    $region68: #{_multiclass_accuracy_impl.1} parent=1 // pred_region
      %191 = dma.done [#allocation15], 64
    $region69: #{_multiclass_accuracy_impl.1} parent=1 // pred_fallthru
      _
    %s192 = sadd.s32 0, 0
    %p193 = scmp.lt.s32.totalorder %s192, 0
    %s194 = scalar_select %p193, %s192, 0
    %p195 = scmp.lt.s32.totalorder %s194, 0
    %s196 = scalar_select %p195, %s194, 0
    %s197 = smul.addr %s196, 4
    %s198 = scalar_lea.vmem %s0, %s197
    %s199 = sadd.s32 0, 0
    %p200 = scmp.lt.s32.totalorder %s199, 0
    %s201 = scalar_select %p200, %s199, 0
    %p202 = scmp.lt.s32.totalorder %s201, 0
    %s203 = scalar_select %p202, %s201, 0
    %s204 = smul.addr %s203, 4
    %s205 = scalar_lea.vmem %s0, %s204
    %s206 = sadd.s32 0, 0
    %p207 = scmp.lt.s32.totalorder %s206, 0
    %s208 = scalar_select %p207, %s206, 0
    %s209 = sadd.s32 0, 0
    %p210 = scmp.lt.s32.totalorder %s209, 0
    %s211 = scalar_select %p210, %s209, 0
    %s212 = sadd.s32 0, 0
    %p213 = scmp.lt.s32.totalorder %s212, 0
    %s214 = scalar_select %p213, %s212, 0
    %s215 = sadd.s32 0, 0
    %p216 = scmp.lt.s32.totalorder %s215, 0
    %s217 = scalar_select %p216, %s215, 0
    %s218 = sadd.s32 0, 0
    %p219 = scmp.lt.s32.totalorder %s218, 0
    %s220 = scalar_select %p219, %s218, 0
    %s221 = sadd.s32 0, 0
    %p222 = scmp.lt.s32.totalorder %s221, 0
    %s223 = scalar_select %p222, %s221, 0
    %s224 = sadd.s32 0, 0
    %p225 = scmp.lt.s32.totalorder %s224, 0
    %s226 = scalar_select %p225, %s224, 0
    %s227 = sadd.s32 0, 0
    %p228 = scmp.lt.s32.totalorder %s227, 0
    %s229 = scalar_select %p228, %s227, 0
    %s230 = sadd.s32 0, 0
    %p231 = scmp.lt.s32.totalorder %s230, 0
    %s232 = scalar_select %p231, %s230, 0
    %p233 = scmp.eq.s32.totalorder 0, 0
    // Predicated region
    $region70: #{_multiclass_accuracy_impl.1} parent=1 // pred_check
      %p234 = pneg %p233
    $region71: #{_multiclass_accuracy_impl.1} parent=1 // pred_check_branch
      %236 = sbr.rel (%p234) target = $region73
    $region72: #{_multiclass_accuracy_impl.1} parent=1 // pred_region
      %s237 = scalar_lea.smem [#allocation16], 0
      %238 = sst [smem:[%s237]] 0
    $region73: #{_multiclass_accuracy_impl.1} parent=1 // pred_fallthru
      _
    %v239 = vld [vmem:[%s205] sm:$0xf]
    %s240 = sadd.s32 0, 0
    %s241 = smul.u32 %s240, 4
    %v242 = vlaneseq
    %v243 = vshrl.u32 %v242, 7
    %v244 = vstv %s241
    %v245 = vadd.s32 %v244, %v243
    %vm246 = vcmp.lt.s32.totalorder %v245, 4
    %v247 = vlaneseq
    %v248 = vand.u32 %v247, 127
    %v249 = vld [vmem:[#allocation2] sm:$0xf]
    %vm250 = vcmask 257024
    %v251 = vsel %vm250, %v249, -inf
    %252 = vmax.xlane.f32.xlu0 %v251
    %v253 = vpop.xlane.xlu0 %252
    %vm254 = vcmp.eq.f32.partialorder %v249, %v253
    %v255 = vsel %vm254, %v248, 32
    %v256 = vsel %vm250, %v255, 2147483647
    %v257 = vand.u32 %v256, 65535
    %v258 = vshra.s32 %v256, 16
    %v259 = vcvt.s32.f32 %v257
    %v260 = vcvt.s32.f32 %v258
    %261 = vmin.xlane.f32.xlu0 %v260
    %v262 = vpop.xlane.xlu0 %261
    %vm263 = vcmp.eq.f32.partialorder %v260, %v262
    %v264 = vsel %vm263, %v259, inf
    %265 = vmin.xlane.f32.xlu0 %v264
    %v266 = vpop.xlane.xlu0 %265
    %v267 = vcvt.f32.s32 %v266
    %v268 = vcvt.f32.s32 %v262
    %v269 = vshll.u32 %v268, 16
    %v270 = vadd.s32 %v269, %v267
    %vm271 = vcmp.eq.s32.totalorder %v270, %v239
    %v272 = vsel %vm271, 1, 0
    %v273 = vld [vmem:[#allocation5] sm:$0xf]
    %v274 = vsel %vm250, %v273, -inf
    %275 = vmax.xlane.f32.xlu0 %v274
    %v276 = vpop.xlane.xlu0 %275
    %vm277 = vcmp.eq.f32.partialorder %v273, %v276
    %v278 = vsel %vm277, %v248, 32
    %v279 = vsel %vm250, %v278, 2147483647
    %v280 = vand.u32 %v279, 65535
    %v281 = vshra.s32 %v279, 16
    %v282 = vcvt.s32.f32 %v280
    %v283 = vcvt.s32.f32 %v281
    %284 = vmin.xlane.f32.xlu0 %v283
    %v285 = vpop.xlane.xlu0 %284
    %vm286 = vcmp.eq.f32.partialorder %v283, %v285
    %v287 = vsel %vm286, %v282, inf
    %288 = vmin.xlane.f32.xlu0 %v287
    %v289 = vpop.xlane.xlu0 %288
    %v290 = vcvt.f32.s32 %v289
    %v291 = vcvt.f32.s32 %v285
    %v292 = vshll.u32 %v291, 16
    %v293 = vadd.s32 %v292, %v290
    %vm294 = vcmp.eq.s32.totalorder %v293, %v239
    %v295 = vsel %vm294, 1, 0
    %296 = vrot.lane.b32.xlu0 %v295, 127
    %v297 = vpop.permute.xlu0 %296
    %v298 = vadd.s32 %v272, %v297
    %v299 = vld [vmem:[#allocation7] sm:$0xf]
    %v300 = vsel %vm250, %v299, -inf
    %301 = vmax.xlane.f32.xlu0 %v300
    %v302 = vpop.xlane.xlu0 %301
    %vm303 = vcmp.eq.f32.partialorder %v299, %v302
    %v304 = vsel %vm303, %v248, 32
    %v305 = vsel %vm250, %v304, 2147483647
    %v306 = vand.u32 %v305, 65535
    %v307 = vshra.s32 %v305, 16
    %v308 = vcvt.s32.f32 %v306
    %v309 = vcvt.s32.f32 %v307
    %310 = vmin.xlane.f32.xlu0 %v309
    %v311 = vpop.xlane.xlu0 %310
    %vm312 = vcmp.eq.f32.partialorder %v309, %v311
    %v313 = vsel %vm312, %v308, inf
    %314 = vmin.xlane.f32.xlu0 %v313
    %v315 = vpop.xlane.xlu0 %314
    %v316 = vcvt.f32.s32 %v315
    %v317 = vcvt.f32.s32 %v311
    %v318 = vshll.u32 %v317, 16
    %v319 = vadd.s32 %v318, %v316
    %vm320 = vcmp.eq.s32.totalorder %v319, %v239
    %v321 = vsel %vm320, 1, 0
    %322 = vrot.lane.b32.xlu0 %v321, 126
    %v323 = vpop.permute.xlu0 %322
    %v324 = vadd.s32 %v298, %v323
    %v325 = vld [vmem:[#allocation8] sm:$0xf]
    %v326 = vsel %vm250, %v325, -inf
    %327 = vmax.xlane.f32.xlu0 %v326
    %v328 = vpop.xlane.xlu0 %327
    %vm329 = vcmp.eq.f32.partialorder %v325, %v328
    %v330 = vsel %vm329, %v248, 32
    %v331 = vsel %vm250, %v330, 2147483647
    %v332 = vand.u32 %v331, 65535
    %v333 = vshra.s32 %v331, 16
    %v334 = vcvt.s32.f32 %v332
    %v335 = vcvt.s32.f32 %v333
    %336 = vmin.xlane.f32.xlu0 %v335
    %v337 = vpop.xlane.xlu0 %336
    %vm338 = vcmp.eq.f32.partialorder %v335, %v337
    %v339 = vsel %vm338, %v334, inf
    %340 = vmin.xlane.f32.xlu0 %v339
    %v341 = vpop.xlane.xlu0 %340
    %v342 = vcvt.f32.s32 %v341
    %v343 = vcvt.f32.s32 %v337
    %v344 = vshll.u32 %v343, 16
    %v345 = vadd.s32 %v344, %v342
    %vm346 = vcmp.eq.s32.totalorder %v345, %v239
    %v347 = vsel %vm346, 1, 0
    %348 = vrot.lane.b32.xlu0 %v347, 125
    %v349 = vpop.permute.xlu0 %348
    %v350 = vadd.s32 %v324, %v349
    %v351 = vld [vmem:[#allocation10] sm:$0xf]
    %v352 = vsel %vm250, %v351, -inf
    %353 = vmax.xlane.f32.xlu0 %v352
    %v354 = vpop.xlane.xlu0 %353
    %vm355 = vcmp.eq.f32.partialorder %v351, %v354
    %v356 = vsel %vm355, %v248, 32
    %v357 = vsel %vm250, %v356, 2147483647
    %v358 = vand.u32 %v357, 65535
    %v359 = vshra.s32 %v357, 16
    %v360 = vcvt.s32.f32 %v358
    %v361 = vcvt.s32.f32 %v359
    %362 = vmin.xlane.f32.xlu0 %v361
    %v363 = vpop.xlane.xlu0 %362
    %vm364 = vcmp.eq.f32.partialorder %v361, %v363
    %v365 = vsel %vm364, %v360, inf
    %366 = vmin.xlane.f32.xlu0 %v365
    %v367 = vpop.xlane.xlu0 %366
    %v368 = vcvt.f32.s32 %v367
    %v369 = vcvt.f32.s32 %v363
    %v370 = vshll.u32 %v369, 16
    %v371 = vadd.s32 %v370, %v368
    %vm372 = vcmp.eq.s32.totalorder %v371, %v239
    %v373 = vsel %vm372, 1, 0
    %374 = vrot.lane.b32.xlu0 %v373, 124
    %v375 = vpop.permute.xlu0 %374
    %v376 = vadd.s32 %v350, %v375
    %v377 = vld [vmem:[#allocation11] sm:$0xf]
    %v378 = vsel %vm250, %v377, -inf
    %379 = vmax.xlane.f32.xlu0 %v378
    %v380 = vpop.xlane.xlu0 %379
    %vm381 = vcmp.eq.f32.partialorder %v377, %v380
    %v382 = vsel %vm381, %v248, 32
    %v383 = vsel %vm250, %v382, 2147483647
    %v384 = vand.u32 %v383, 65535
    %v385 = vshra.s32 %v383, 16
    %v386 = vcvt.s32.f32 %v384
    %v387 = vcvt.s32.f32 %v385
    %388 = vmin.xlane.f32.xlu0 %v387
    %v389 = vpop.xlane.xlu0 %388
    %vm390 = vcmp.eq.f32.partialorder %v387, %v389
    %v391 = vsel %vm390, %v386, inf
    %392 = vmin.xlane.f32.xlu0 %v391
    %v393 = vpop.xlane.xlu0 %392
    %v394 = vcvt.f32.s32 %v393
    %v395 = vcvt.f32.s32 %v389
    %v396 = vshll.u32 %v395, 16
    %v397 = vadd.s32 %v396, %v394
    %vm398 = vcmp.eq.s32.totalorder %v397, %v239
    %v399 = vsel %vm398, 1, 0
    %400 = vrot.lane.b32.xlu0 %v399, 123
    %v401 = vpop.permute.xlu0 %400
    %v402 = vadd.s32 %v376, %v401
    %v403 = vld [vmem:[#allocation13] sm:$0xf]
    %v404 = vsel %vm250, %v403, -inf
    %405 = vmax.xlane.f32.xlu0 %v404
    %v406 = vpop.xlane.xlu0 %405
    %vm407 = vcmp.eq.f32.partialorder %v403, %v406
    %v408 = vsel %vm407, %v248, 32
    %v409 = vsel %vm250, %v408, 2147483647
    %v410 = vand.u32 %v409, 65535
    %v411 = vshra.s32 %v409, 16
    %v412 = vcvt.s32.f32 %v410
    %v413 = vcvt.s32.f32 %v411
    %414 = vmin.xlane.f32.xlu0 %v413
    %v415 = vpop.xlane.xlu0 %414
    %vm416 = vcmp.eq.f32.partialorder %v413, %v415
    %v417 = vsel %vm416, %v412, inf
    %418 = vmin.xlane.f32.xlu0 %v417
    %v419 = vpop.xlane.xlu0 %418
    %v420 = vcvt.f32.s32 %v419
    %v421 = vcvt.f32.s32 %v415
    %v422 = vshll.u32 %v421, 16
    %v423 = vadd.s32 %v422, %v420
    %vm424 = vcmp.eq.s32.totalorder %v423, %v239
    %v425 = vsel %vm424, 1, 0
    %426 = vrot.lane.b32.xlu0 %v425, 122
    %v427 = vpop.permute.xlu0 %426
    %v428 = vadd.s32 %v402, %v427
    %v429 = vld [vmem:[#allocation14] sm:$0xf]
    %v430 = vsel %vm250, %v429, -inf
    %431 = vmax.xlane.f32.xlu0 %v430
    %v432 = vpop.xlane.xlu0 %431
    %vm433 = vcmp.eq.f32.partialorder %v429, %v432
    %v434 = vsel %vm433, %v248, 32
    %v435 = vsel %vm250, %v434, 2147483647
    %v436 = vand.u32 %v435, 65535
    %v437 = vshra.s32 %v435, 16
    %v438 = vcvt.s32.f32 %v436
    %v439 = vcvt.s32.f32 %v437
    %440 = vmin.xlane.f32.xlu0 %v439
    %v441 = vpop.xlane.xlu0 %440
    %vm442 = vcmp.eq.f32.partialorder %v439, %v441
    %v443 = vsel %vm442, %v438, inf
    %444 = vmin.xlane.f32.xlu0 %v443
    %v445 = vpop.xlane.xlu0 %444
    %v446 = vcvt.f32.s32 %v445
    %v447 = vcvt.f32.s32 %v441
    %v448 = vshll.u32 %v447, 16
    %v449 = vadd.s32 %v448, %v446
    %vm450 = vcmp.eq.s32.totalorder %v449, %v239
    %v451 = vsel %vm450, 1, 0
    %452 = vrot.lane.b32.xlu0 %v451, 121
    %v453 = vpop.permute.xlu0 %452
    %v454 = vadd.s32 %v428, %v453
    %v455 = vsel %vm246, %v454, 0
    %vm456 = vcmask 3072
    %v457 = vsel %vm456, %v455, 0
    %v458 = vand.u32 %v457, 65535
    %v459 = vshrl.u32 %v457, 16
    %v460 = vcvt.s32.f32 %v458
    %v461 = vcvt.s32.f32 %v459
    %462 = vadd.xlane.f32.xlu0 %v460
    %v463 = vpop.xlane.xlu0 %462
    %464 = vadd.xlane.f32.xlu0 %v461
    %v465 = vpop.xlane.xlu0 %464
    %v466 = vcvt.f32.s32 %v463
    %v467 = vcvt.f32.s32 %v465
    %v468 = vshll.u32 %v467, 16
    %v469 = vadd.s32 %v468, %v466
    %v470 = vrot.slane %v469, 4
    %v471 = vadd.s32 %v469, %v470
    %v472 = vrot.slane %v471, 2
    %v473 = vadd.s32 %v471, %v472
    %v474 = vrot.slane %v473, 1
    %v475 = vadd.s32 %v473, %v474
    %s476 = vtos %v475
    %s477 = sld [smem:[#allocation16]]
    %s478 = sadd.s32 %s477, %s476
    %s479 = scalar_lea.smem [#allocation16], 0
    %480 = sst [smem:[%s479]] %s478
    // Predicated region
    $region74: #{_multiclass_accuracy_impl.1} parent=1 // pred_check
      _
    $region75: #{_multiclass_accuracy_impl.1} parent=1 // pred_check_branch
      %482 = sbr.rel (0) target = $region77
    $region76: #{_multiclass_accuracy_impl.1} parent=1 // pred_region
      %484 = vsyncadd [#allocation4], 0
      %s486 = sshll.u32 %s9, 4
      %s487 = int_to_ptr.hbm [resolvable:$true] %s486
      %489 = dma.smem_to_hbm [#allocation16], 16, %s487, [#allocation4]
    $region77: #{_multiclass_accuracy_impl.1} parent=1 // pred_fallthru
      _
    // Predicated region
    $region78: #{_multiclass_accuracy_impl.1} parent=1 // pred_check
      _
    $region79: #{_multiclass_accuracy_impl.1} parent=1 // pred_check_branch
      %491 = sbr.rel (0) target = $region81
    $region80: #{_multiclass_accuracy_impl.1} parent=1 // pred_region
      %493 = dma.done [#allocation4], 16
    $region81: #{_multiclass_accuracy_impl.1} parent=1 // pred_fallthru
      _
    %494 = sfence
    %495 = vsyncpa [#allocation3], 1
    %496 = vsyncpa [#allocation6], 1
    %497 = vsyncpa [#allocation9], 1
    %498 = vsyncpa [#allocation12], 1
    %499 = vsyncpa [#allocation15], 1
    %500 = vsyncpa [#allocation4], 1

</llo_original>
